<compile_context>
chip_gen: v7x
topology: tpu7x:2x2x1
jax: 0.10.0
libtpu: 0.0.40
codegen_flags: <defaults>
</compile_context>

<pallas_src>
import functools

import jax
import jax.numpy as jnp
from jax.experimental import pallas as pl
from jax.experimental.pallas import tpu as pltpu


def _round_up(x, m):
    return ((x + m - 1) // m) * m


def actor_critic_kernel(x_ref, w1_ref, b1_ref, w2_ref, b2_ref, w3_ref, b3_ref,
                        out_ref, *, output_dim):
    x = x_ref[...]                                                     # [tb, D]

    # Fused actor+critic trunk: 3 lane-dense matmuls.
    h = jnp.tanh(jnp.dot(x, w1_ref[...], preferred_element_type=jnp.float32)
                 + b1_ref[...])                                        # [tb, 2H]
    h = jnp.tanh(jnp.dot(h, w2_ref[...], preferred_element_type=jnp.float32)
                 + b2_ref[...])                                        # [tb, 2H]
    y = (jnp.dot(h, w3_ref[...], preferred_element_type=jnp.float32)
         + b3_ref[...])                                                # [tb, O+1]

    logits = y[:, :output_dim]                                         # actor head
    value = y[:, output_dim:]                                          # critic head

    # Numerically-stable softmax; reciprocal on the EUP + one Newton refinement.
    m = jnp.max(logits, axis=-1, keepdims=True)
    e = jnp.exp(logits - m)
    denom = jnp.sum(e, axis=-1, keepdims=True)
    r = pl.reciprocal(denom, approx=True)
    r = r * (2.0 - denom * r)

    # Single lane-dense output slab: [prob | value].
    out_ref[:, :output_dim] = e * r
    out_ref[:, output_dim:] = value


def pack_params(params):
    """Pack separate actor/critic weights into 3 fused (lane-dense) layers."""
    wa1, wc1 = params["wa1"], params["wc1"]
    hidden = wa1.shape[1]
    output_dim = params["wa3"].shape[1]
    two_h = 2 * hidden

    w1 = jnp.concatenate([wa1, wc1], axis=1)                            # [D, 2H]
    b1 = jnp.concatenate([params["ba1"], params["bc1"]], axis=1)        # [1, 2H]

    w2 = jnp.zeros((two_h, two_h), jnp.float32)
    w2 = w2.at[:hidden, :hidden].set(params["wa2"])
    w2 = w2.at[hidden:, hidden:].set(params["wc2"])                     # block-diag
    b2 = jnp.concatenate([params["ba2"], params["bc2"]], axis=1)        # [1, 2H]

    w3 = jnp.zeros((two_h, output_dim + 1), jnp.float32)
    w3 = w3.at[:hidden, :output_dim].set(params["wa3"])
    w3 = w3.at[hidden:, output_dim:].set(params["wc3"])                 # block
    b3 = jnp.concatenate([params["ba3"], params["bc3"]], axis=1)        # [1, O+1]

    return w1, b1, w2, b2, w3, b3


def actor_critic_forward(state, params, *, tile_b_max=512):
    """state: [B, input_dim] f32 -> (action_prob [B, O], state_value [B, 1])."""
    B, input_dim = state.shape
    hidden = params["wa1"].shape[1]
    output_dim = params["wa3"].shape[1]
    two_h = 2 * hidden
    fused_out = output_dim + 1

    w1, b1, w2, b2, w3, b3 = pack_params(params)

    # Batch tiling: multiple of 8 sublanes; capped so double-buffered tiles fit
    # comfortably even within v7x's 64 MiB physical VMEM.
    tile_b = min(_round_up(B, 8), tile_b_max)
    b_pad = _round_up(B, tile_b)
    if b_pad != B:
        state = jnp.pad(state, ((0, b_pad - B), (0, 0)))

    grid = (b_pad // tile_b,)
    resident = lambda i: (0, 0)     # weights stay VMEM-resident across grid steps

    flops = 2 * b_pad * (input_dim * two_h + two_h * two_h + two_h * fused_out)
    transcendentals = b_pad * (2 * two_h + output_dim)
    bytes_accessed = 4 * (b_pad * input_dim + b_pad * fused_out
                          + input_dim * two_h + two_h * two_h + two_h * fused_out
                          + 2 * two_h + fused_out)

    kernel = functools.partial(actor_critic_kernel, output_dim=output_dim)

    out = pl.pallas_call(
        kernel,
        out_shape=jax.ShapeDtypeStruct((b_pad, fused_out), jnp.float32),
        grid=grid,
        in_specs=[
            pl.BlockSpec((tile_b, input_dim), lambda i: (i, 0)),   # streamed state
            pl.BlockSpec((input_dim, two_h), resident),
            pl.BlockSpec((1, two_h), resident),
            pl.BlockSpec((two_h, two_h), resident),
            pl.BlockSpec((1, two_h), resident),
            pl.BlockSpec((two_h, fused_out), resident),
            pl.BlockSpec((1, fused_out), resident),
        ],
        out_specs=pl.BlockSpec((tile_b, fused_out), lambda i: (i, 0)),
        compiler_params=pltpu.CompilerParams(
            dimension_semantics=("parallel",),
        ),
        cost_estimate=pl.CostEstimate(
            flops=flops,
            transcendentals=transcendentals,
            bytes_accessed=bytes_accessed,
        ),
    )(state, w1, b1, w2, b2, w3, b3)

    out = out[:B]
    return out[:, :output_dim], out[:, output_dim:]


def init_params(key, input_dim, output_dim, hidden_dim=64):
    """Deterministic synthetic init (uniform, roughly like PyTorch's default)."""
    ks = jax.random.split(key, 12)

    def lin(kw, kb, fan_in, fan_out):
        bound = 1.0 / jnp.sqrt(fan_in)
        w = jax.random.uniform(kw, (fan_in, fan_out), jnp.float32, -bound, bound)
        b = jax.random.uniform(kb, (1, fan_out), jnp.float32, -bound, bound)
        return w, b

    wa1, ba1 = lin(ks[0], ks[1], input_dim, hidden_dim)
    wa2, ba2 = lin(ks[2], ks[3], hidden_dim, hidden_dim)
    wa3, ba3 = lin(ks[4], ks[5], hidden_dim, output_dim)
    wc1, bc1 = lin(ks[6], ks[7], input_dim, hidden_dim)
    wc2, bc2 = lin(ks[8], ks[9], hidden_dim, hidden_dim)
    wc3, bc3 = lin(ks[10], ks[11], hidden_dim, 1)
    return dict(wa1=wa1, ba1=ba1, wa2=wa2, ba2=ba2, wa3=wa3, ba3=ba3,
                wc1=wc1, bc1=bc1, wc2=wc2, bc2=bc2, wc3=wc3, bc3=bc3)


def _reference_forward(state, p):
    h = jnp.tanh(state @ p["wa1"] + p["ba1"])
    h = jnp.tanh(h @ p["wa2"] + p["ba2"])
    logits = h @ p["wa3"] + p["ba3"]
    prob = jax.nn.softmax(logits, axis=-1)
    g = jnp.tanh(state @ p["wc1"] + p["bc1"])
    g = jnp.tanh(g @ p["wc2"] + p["bc2"])
    value = g @ p["wc3"] + p["bc3"]
    return prob, value


if __name__ == "__main__":
    key = jax.random.PRNGKey(0)
    k_params, k_state = jax.random.split(key)

    B, INPUT_DIM, OUTPUT_DIM, HIDDEN_DIM = 4, 16, 6, 64
    params = init_params(k_params, INPUT_DIM, OUTPUT_DIM, HIDDEN_DIM)
    state = jax.random.normal(k_state, (B, INPUT_DIM), jnp.float32)

    prob, value = actor_critic_forward(state, params)
    jax.block_until_ready((prob, value))

    # sanity-check against pure-JAX reference
    prob_ref, value_ref = _reference_forward(state, params)
    assert prob.shape == (B, OUTPUT_DIM) and value.shape == (B, 1)
    assert jnp.allclose(prob, prob_ref, atol=1e-5, rtol=1e-5)
    assert jnp.allclose(value, value_ref, atol=1e-5, rtol=1e-5)
    assert jnp.allclose(jnp.sum(prob, axis=-1), 1.0, atol=1e-5)

    print("KERNEL_OK")
</pallas_src>

<mosaic_0001>
module attributes {stable_mosaic.version = 11 : i64} {
  func.func @actor_critic_kernel(%arg0: i32, %arg1: memref<8x16xf32, #tpu.memory_space<vmem>>, %arg2: memref<16x128xf32, #tpu.memory_space<vmem>>, %arg3: memref<1x128xf32, #tpu.memory_space<vmem>>, %arg4: memref<128x128xf32, #tpu.memory_space<vmem>>, %arg5: memref<1x128xf32, #tpu.memory_space<vmem>>, %arg6: memref<128x7xf32, #tpu.memory_space<vmem>>, %arg7: memref<1x7xf32, #tpu.memory_space<vmem>>, %arg8: memref<8x7xf32, #tpu.memory_space<vmem>>) attributes {dimension_semantics = [#tpu.dimension_semantics<parallel>], iteration_bounds = array<i64: 1>, scalar_prefetch = 0 : i64, scratch_operands = 0 : i64, tpu.core_type = #tpu.core_type<tc>, window_params = [{transform_indices = @transform_0, window_bounds = array<i64: 8, 16>}, {pipeline_mode = #tpu.pipeline_mode<synchronous>, transform_indices = @transform_1, window_bounds = array<i64: 16, 128>}, {pipeline_mode = #tpu.pipeline_mode<synchronous>, transform_indices = @transform_2, window_bounds = array<i64: 1, 128>}, {pipeline_mode = #tpu.pipeline_mode<synchronous>, transform_indices = @transform_3, window_bounds = array<i64: 128, 128>}, {pipeline_mode = #tpu.pipeline_mode<synchronous>, transform_indices = @transform_4, window_bounds = array<i64: 1, 128>}, {pipeline_mode = #tpu.pipeline_mode<synchronous>, transform_indices = @transform_5, window_bounds = array<i64: 128, 7>}, {pipeline_mode = #tpu.pipeline_mode<synchronous>, transform_indices = @transform_6, window_bounds = array<i64: 1, 7>}, {transform_indices = @transform_7, window_bounds = array<i64: 8, 7>}]} {
    %c0 = arith.constant 0 : index
    %c0_0 = arith.constant 0 : index
    %0 = vector.load %arg1[%c0, %c0_0] : memref<8x16xf32, #tpu.memory_space<vmem>>, vector<8x16xf32>
    %c0_1 = arith.constant 0 : index
    %c0_2 = arith.constant 0 : index
    %1 = vector.load %arg2[%c0_1, %c0_2] : memref<16x128xf32, #tpu.memory_space<vmem>>, vector<16x128xf32>
    %cst = arith.constant dense<0.000000e+00> : vector<8x128xf32>
    %2 = tpu.matmul %0, %1, %cst {dimension_numbers = #tpu.dot_dimension_numbers<[1], [0], [0], [1], [0, 0, 1, 1], [], []>} : vector<8x16xf32>, vector<16x128xf32>, vector<8x128xf32> -> vector<8x128xf32>
    %c0_3 = arith.constant 0 : index
    %c0_4 = arith.constant 0 : index
    %3 = vector.load %arg3[%c0_3, %c0_4] : memref<1x128xf32, #tpu.memory_space<vmem>>, vector<1x128xf32>
    %4 = vector.broadcast %3 : vector<1x128xf32> to vector<8x128xf32>
    %5 = arith.addf %2, %4 : vector<8x128xf32>
    %6 = math.tanh %5 : vector<8x128xf32>
    %c0_5 = arith.constant 0 : index
    %c0_6 = arith.constant 0 : index
    %7 = vector.load %arg4[%c0_5, %c0_6] : memref<128x128xf32, #tpu.memory_space<vmem>>, vector<128x128xf32>
    %cst_7 = arith.constant dense<0.000000e+00> : vector<8x128xf32>
    %8 = tpu.matmul %6, %7, %cst_7 {dimension_numbers = #tpu.dot_dimension_numbers<[1], [0], [0], [1], [0, 0, 1, 1], [], []>} : vector<8x128xf32>, vector<128x128xf32>, vector<8x128xf32> -> vector<8x128xf32>
    %c0_8 = arith.constant 0 : index
    %c0_9 = arith.constant 0 : index
    %9 = vector.load %arg5[%c0_8, %c0_9] : memref<1x128xf32, #tpu.memory_space<vmem>>, vector<1x128xf32>
    %10 = vector.broadcast %9 : vector<1x128xf32> to vector<8x128xf32>
    %11 = arith.addf %8, %10 : vector<8x128xf32>
    %12 = math.tanh %11 : vector<8x128xf32>
    %c0_10 = arith.constant 0 : index
    %c0_11 = arith.constant 0 : index
    %13 = vector.load %arg6[%c0_10, %c0_11] : memref<128x7xf32, #tpu.memory_space<vmem>>, vector<128x7xf32>
    %cst_12 = arith.constant dense<0.000000e+00> : vector<8x7xf32>
    %14 = tpu.matmul %12, %13, %cst_12 {dimension_numbers = #tpu.dot_dimension_numbers<[1], [0], [0], [1], [0, 0, 1, 1], [], []>} : vector<8x128xf32>, vector<128x7xf32>, vector<8x7xf32> -> vector<8x7xf32>
    %c0_13 = arith.constant 0 : index
    %c0_14 = arith.constant 0 : index
    %15 = vector.load %arg7[%c0_13, %c0_14] : memref<1x7xf32, #tpu.memory_space<vmem>>, vector<1x7xf32>
    %16 = vector.broadcast %15 : vector<1x7xf32> to vector<8x7xf32>
    %17 = arith.addf %14, %16 : vector<8x7xf32>
    %18 = vector.extract_strided_slice %17 {offsets = [0, 0], sizes = [8, 6], strides = [1, 1]} : vector<8x7xf32> to vector<8x6xf32>
    %19 = vector.extract_strided_slice %17 {offsets = [0, 6], sizes = [8, 1], strides = [1, 1]} : vector<8x7xf32> to vector<8x1xf32>
    %cst_15 = arith.constant dense<0xFF800000> : vector<8xf32>
    %20 = vector.multi_reduction <maximumf>, %18, %cst_15 [1] : vector<8x6xf32> to vector<8xf32>
    %21 = vector.shape_cast %20 : vector<8xf32> to vector<8x1xf32>
    %22 = vector.broadcast %21 : vector<8x1xf32> to vector<8x6xf32>
    %23 = arith.subf %18, %22 : vector<8x6xf32>
    %24 = math.exp %23 : vector<8x6xf32>
    %cst_16 = arith.constant dense<0.000000e+00> : vector<8xf32>
    %25 = vector.multi_reduction <add>, %24, %cst_16 [1] : vector<8x6xf32> to vector<8xf32>
    %26 = vector.shape_cast %25 : vector<8xf32> to vector<8x1xf32>
    %27 = tpu.reciprocal %26 {approx = true} : vector<8x1xf32> -> vector<8x1xf32>
    %28 = arith.mulf %26, %27 : vector<8x1xf32>
    %cst_17 = arith.constant 2.000000e+00 : f32
    %29 = vector.broadcast %cst_17 : f32 to vector<8x1xf32>
    %30 = arith.subf %29, %28 : vector<8x1xf32>
    %31 = arith.mulf %27, %30 : vector<8x1xf32>
    %32 = vector.broadcast %31 : vector<8x1xf32> to vector<8x6xf32>
    %33 = arith.mulf %24, %32 : vector<8x6xf32>
    %c0_18 = arith.constant 0 : index
    %c0_19 = arith.constant 0 : index
    %34 = vector.load %arg8[%c0_18, %c0_19] : memref<8x7xf32, #tpu.memory_space<vmem>>, vector<8x6xf32>
    tpu.vector_store %arg8[%c0_18, %c0_19], %33 {strides = array<i32>} : memref<8x7xf32, #tpu.memory_space<vmem>>, vector<8x6xf32>,
    %c0_20 = arith.constant 0 : index
    %c6 = arith.constant 6 : index
    %35 = vector.load %arg8[%c0_20, %c6] : memref<8x7xf32, #tpu.memory_space<vmem>>, vector<8x1xf32>
    tpu.vector_store %arg8[%c0_20, %c6], %19 {strides = array<i32>} : memref<8x7xf32, #tpu.memory_space<vmem>>, vector<8x1xf32>,
    return
  }
  func.func @transform_0(%arg0: i32) -> (i32, i32) {
    %c0_i32 = arith.constant 0 : i32
    %c0_i32_0 = arith.constant 0 : i32
    return %arg0, %c0_i32 : i32, i32
  }
  func.func @transform_1(%arg0: i32) -> (i32, i32) {
    %c0_i32 = arith.constant 0 : i32
    %c0_i32_0 = arith.constant 0 : i32
    %c0_i32_1 = arith.constant 0 : i32
    return %c0_i32, %c0_i32_0 : i32, i32
  }
  func.func @transform_2(%arg0: i32) -> (i32, i32) {
    %c0_i32 = arith.constant 0 : i32
    %c0_i32_0 = arith.constant 0 : i32
    %c0_i32_1 = arith.constant 0 : i32
    return %c0_i32, %c0_i32_0 : i32, i32
  }
  func.func @transform_3(%arg0: i32) -> (i32, i32) {
    %c0_i32 = arith.constant 0 : i32
    %c0_i32_0 = arith.constant 0 : i32
    %c0_i32_1 = arith.constant 0 : i32
    return %c0_i32, %c0_i32_0 : i32, i32
  }
  func.func @transform_4(%arg0: i32) -> (i32, i32) {
    %c0_i32 = arith.constant 0 : i32
    %c0_i32_0 = arith.constant 0 : i32
    %c0_i32_1 = arith.constant 0 : i32
    return %c0_i32, %c0_i32_0 : i32, i32
  }
  func.func @transform_5(%arg0: i32) -> (i32, i32) {
    %c0_i32 = arith.constant 0 : i32
    %c0_i32_0 = arith.constant 0 : i32
    %c0_i32_1 = arith.constant 0 : i32
    return %c0_i32, %c0_i32_0 : i32, i32
  }
  func.func @transform_6(%arg0: i32) -> (i32, i32) {
    %c0_i32 = arith.constant 0 : i32
    %c0_i32_0 = arith.constant 0 : i32
    %c0_i32_1 = arith.constant 0 : i32
    return %c0_i32, %c0_i32_0 : i32, i32
  }
  func.func @transform_7(%arg0: i32) -> (i32, i32) {
    %c0_i32 = arith.constant 0 : i32
    %c0_i32_0 = arith.constant 0 : i32
    return %arg0, %c0_i32 : i32, i32
  }
}

</mosaic_0001>

<llo_original>
// kernel: tpu_custom_call.1
$region0: #{tpu_custom_call.1}
  #allocation0 [shape = 'u32[]', space=smem, size = 0x4, offset = 0x4, fixed_abs, tag = 'smem constant byte address 0x4 - core index']
  #allocation1 [shape = 'u32[144,128]{1,0:T(1,128)}', space=vmem, size = 0x12000, scoped, tag = 'internal scratch']
  %s0 = inlined_call_operand.hbm [shape: f32[8,16], index: 0, kind: input, shape index: {}]
  %s1 = inlined_call_operand.vmem [shape: f32[16,128], index: 1, kind: input, shape index: {}]
  %s2 = inlined_call_operand.vmem [shape: f32[1,128], index: 2, kind: input, shape index: {}]
  %s3 = inlined_call_operand.vmem [shape: f32[128,128], index: 3, kind: input, shape index: {}]
  %s4 = inlined_call_operand.vmem [shape: f32[1,128], index: 4, kind: input, shape index: {}]
  %s5 = inlined_call_operand.vmem [shape: f32[128,7], index: 5, kind: input, shape index: {}]
  %s6 = inlined_call_operand.vmem [shape: f32[1,7], index: 6, kind: input, shape index: {}]
  %s7 = inlined_call_operand.hbm [shape: f32[8,7], index: 7, kind: output, shape index: {}]
  %s8 = sld [smem:[#allocation0]]
  $region42: #{tpu_custom_call.1} parent=0
    _
  %s10 = ssub.s32 1, %s8
  %s11 = scalar_select 0, %s10, %s8
  $region1: #{tpu_custom_call.1} parent=0
    #allocation2 [shape = 'u8[4096]{0}', space=vmem, size = 0x1000, scoped, tag = 'input window, operand 0, single buffered']
    #allocation3 [shape = 's32[1]{0}', space=sflag, size = 0x4, scoped, tag = 'scoped memory for tpu_custom_call.1']
    #allocation4 [shape = 's32[1]{0}', space=sflag, size = 0x4, scoped, tag = 'scoped memory for tpu_custom_call.1']
    #allocation5 [shape = 'u8[4096]{0}', space=vmem, size = 0x1000, scoped, tag = 'output window, operand 0, single buffered']
    %12 = vsyncpa [#allocation3], 0
    %13 = vsyncpa [#allocation4], 0
    // Predicated region
    $region2: #{tpu_custom_call.1} parent=1 // pred_check
      _
    $region3: #{tpu_custom_call.1} parent=1 // pred_check_branch
      %15 = sbr.rel (0) target = $region5
    $region4: #{tpu_custom_call.1} parent=1 // pred_region
      %s17 = ssub.s32 128, 128
      %18 = vsyncadd [#allocation3], %s17
      %s20 = sshll.u32 [#allocation2], 4
      %s21 = int_to_ptr.vmem [resolvable:$true] %s20
      %23 = dma.hbm_to_vmem [thread:$0]  %s0, 128, %s21, [#allocation3]
    $region5: #{tpu_custom_call.1} parent=1 // pred_fallthru
      _
    // Predicated region
    $region6: #{tpu_custom_call.1} parent=1 // pred_check
      _
    $region7: #{tpu_custom_call.1} parent=1 // pred_check_branch
      %25 = sbr.rel (0) target = $region9
    $region8: #{tpu_custom_call.1} parent=1 // pred_region
      _
    $region9: #{tpu_custom_call.1} parent=1 // pred_fallthru
      _
    // Predicated region
    $region10: #{tpu_custom_call.1} parent=1 // pred_check
      _
    $region11: #{tpu_custom_call.1} parent=1 // pred_check_branch
      %27 = sbr.rel (0) target = $region13
    $region12: #{tpu_custom_call.1} parent=1 // pred_region
      _
    $region13: #{tpu_custom_call.1} parent=1 // pred_fallthru
      _
    // Predicated region
    $region14: #{tpu_custom_call.1} parent=1 // pred_check
      _
    $region15: #{tpu_custom_call.1} parent=1 // pred_check_branch
      %29 = sbr.rel (0) target = $region17
    $region16: #{tpu_custom_call.1} parent=1 // pred_region
      _
    $region17: #{tpu_custom_call.1} parent=1 // pred_fallthru
      _
    // Predicated region
    $region18: #{tpu_custom_call.1} parent=1 // pred_check
      _
    $region19: #{tpu_custom_call.1} parent=1 // pred_check_branch
      %31 = sbr.rel (0) target = $region21
    $region20: #{tpu_custom_call.1} parent=1 // pred_region
      _
    $region21: #{tpu_custom_call.1} parent=1 // pred_fallthru
      _
    // Predicated region
    $region22: #{tpu_custom_call.1} parent=1 // pred_check
      _
    $region23: #{tpu_custom_call.1} parent=1 // pred_check_branch
      %33 = sbr.rel (0) target = $region25
    $region24: #{tpu_custom_call.1} parent=1 // pred_region
      _
    $region25: #{tpu_custom_call.1} parent=1 // pred_fallthru
      _
    // Predicated region
    $region26: #{tpu_custom_call.1} parent=1 // pred_check
      _
    $region27: #{tpu_custom_call.1} parent=1 // pred_check_branch
      %35 = sbr.rel (0) target = $region29
    $region28: #{tpu_custom_call.1} parent=1 // pred_region
      _
    $region29: #{tpu_custom_call.1} parent=1 // pred_fallthru
      _
    // Predicated region
    $region30: #{tpu_custom_call.1} parent=1 // pred_check
      _
    $region31: #{tpu_custom_call.1} parent=1 // pred_check_branch
      %37 = sbr.rel (0) target = $region33
    $region32: #{tpu_custom_call.1} parent=1 // pred_region
      %38 = dma.done [#allocation3], 128
    $region33: #{tpu_custom_call.1} parent=1 // pred_fallthru
      _
    %v39 = vld [vmem:[#allocation2] sm:$0xff]
    %v40 = vld [vmem:[%s1] sm:$0xff]
    %v41 = vld [vmem:[%s1 + $0x8] sm:$0xff]
    %v42 = vld [vmem:[%s2] sm:$0x1]
    %v44 = vlaneseq
    %v45 = vshrl.u32 %v44, 7
    %v46 = vsub.s32 0, %v45
    %v47 = vrot.slane %v42, %v46
    %vm49 = vcmask 130048
    %v51 = vsel %vm49, %v39, 0
    %53 = vmatprep.subr.mxu0 0.0
    %54 = vmatpush1.msra.mxu0 %v40
    %55 = vmatprep.subr.mxu0 0.0
    %56 = vmatpush1.msra.mxu0 %v41
    %57 = vmatprep.subr.mxu0 0.0
    %58 = vmatpush1.msra.mxu0 0.0
    %59 = vmatprep.subr.mxu0 0.0
    %60 = vmatpush1.msra.mxu0 0.0
    %61 = vmatprep.subr.mxu0 0.0
    %62 = vmatpush1.msra.mxu0 0.0
    %63 = vmatprep.subr.mxu0 0.0
    %64 = vmatpush1.msra.mxu0 0.0
    %65 = vmatprep.subr.mxu0 0.0
    %66 = vmatpush1.msra.mxu0 0.0
    %67 = vmatprep.subr.mxu0 0.0
    %68 = vmatpush1.msra.mxu0 0.0
    %69 = vmatprep.subr.mxu0 0.0
    %70 = vmatpush1.msra.mxu0 0.0
    %71 = vmatprep.subr.mxu0 0.0
    %72 = vmatpush1.msra.mxu0 0.0
    %73 = vmatprep.subr.mxu0 0.0
    %74 = vmatpush1.msra.mxu0 0.0
    %75 = vmatprep.subr.mxu0 0.0
    %76 = vmatpush1.msra.mxu0 0.0
    %77 = vmatprep.subr.mxu0 0.0
    %78 = vmatpush1.msra.mxu0 0.0
    %79 = vmatprep.subr.mxu0 0.0
    %80 = vmatpush1.msra.mxu0 0.0
    %81 = vmatprep.subr.mxu0 0.0
    %82 = vmatpush1.msra.mxu0 0.0
    %83 = vmatprep.subr.mxu0 0.0
    %84 = vmatpush1.msra.mxu0 0.0
    %85 = vmatprep.subr.mxu0 0.0
    %86 = vmatpush1.msra.mxu0 0.0
    %87 = vmatprep.subr.mxu0 0.0
    %88 = vmatpush1.msra.mxu0 0.0
    %89 = vmatprep.subr.mxu0 0.0
    %90 = vmatpush1.msra.mxu0 0.0
    %91 = vmatprep.subr.mxu0 0.0
    %92 = vmatpush1.msra.mxu0 0.0
    %93 = vmatprep.subr.mxu0 0.0
    %94 = vmatpush1.msra.mxu0 0.0
    %95 = vmatprep.subr.mxu0 0.0
    %96 = vmatpush1.msra.mxu0 0.0
    %97 = vmatprep.subr.mxu0 0.0
    %98 = vmatpush1.msra.mxu0 0.0
    %99 = vmatprep.subr.mxu0 0.0
    %100 = vmatpush1.msra.mxu0 0.0
    %101 = vmatprep.subr.mxu0 0.0
    %102 = vmatpush1.msra.mxu0 0.0
    %103 = vmatprep.subr.mxu0 0.0
    %104 = vmatpush1.msra.mxu0 0.0
    %105 = vmatprep.subr.mxu0 0.0
    %106 = vmatpush1.msra.mxu0 0.0
    %107 = vmatprep.subr.mxu0 0.0
    %108 = vmatpush1.msra.mxu0 0.0
    %109 = vmatprep.subr.mxu0 0.0
    %110 = vmatpush1.msra.mxu0 0.0
    %111 = vmatprep.subr.mxu0 0.0
    %112 = vmatpush1.msra.mxu0 0.0
    %113 = vmatprep.subr.mxu0 0.0
    %114 = vmatpush1.msra.mxu0 0.0
    %115 = vmatprep.subr.mxu0 0.0
    %116 = vmatpush1.msra.mxu0 0.0
    %117 = vmatprep.mubr.f32.mxu0 0.0
    %118 = vmatmul.mubr.f32.gmra.mrb[0].mxu0 %v51
    %v119 = vpop.f32.mrb[0].mxu0
    %v120 = vadd.f32 %v47, %v119
    %v121 = vpop.f32.mrb[0].mxu0
    %122 = vdwg.mxu0
    %v123 = vtanh.pop %v120
    %v124 = vld [vmem:[%s3] sm:$0xff]
    %v125 = vld [vmem:[%s3 + $0x8] sm:$0xff]
    %v126 = vld [vmem:[%s3 + $0x10] sm:$0xff]
    %v127 = vld [vmem:[%s3 + $0x18] sm:$0xff]
    %v128 = vld [vmem:[%s3 + $0x20] sm:$0xff]
    %v129 = vld [vmem:[%s3 + $0x28] sm:$0xff]
    %v130 = vld [vmem:[%s3 + $0x30] sm:$0xff]
    %v131 = vld [vmem:[%s3 + $0x38] sm:$0xff]
    %v132 = vld [vmem:[%s3 + $0x40] sm:$0xff]
    %v133 = vld [vmem:[%s3 + $0x48] sm:$0xff]
    %v134 = vld [vmem:[%s3 + $0x50] sm:$0xff]
    %v135 = vld [vmem:[%s3 + $0x58] sm:$0xff]
    %v136 = vld [vmem:[%s3 + $0x60] sm:$0xff]
    %v137 = vld [vmem:[%s3 + $0x68] sm:$0xff]
    %v138 = vld [vmem:[%s3 + $0x70] sm:$0xff]
    %v139 = vld [vmem:[%s3 + $0x78] sm:$0xff]
    %v140 = vld [vmem:[%s4] sm:$0x1]
    %v142 = vlaneseq
    %v143 = vshrl.u32 %v142, 7
    %v144 = vsub.s32 0, %v143
    %v145 = vrot.slane %v140, %v144
    %147 = vmatprep.subr.mxu0 0.0
    %148 = vmatpush1.msra.mxu0 %v124
    %149 = vmatprep.subr.mxu0 0.0
    %150 = vmatpush1.msra.mxu0 %v125
    %151 = vmatprep.subr.mxu0 0.0
    %152 = vmatpush1.msra.mxu0 %v126
    %153 = vmatprep.subr.mxu0 0.0
    %154 = vmatpush1.msra.mxu0 %v127
    %155 = vmatprep.subr.mxu0 0.0
    %156 = vmatpush1.msra.mxu0 %v128
    %157 = vmatprep.subr.mxu0 0.0
    %158 = vmatpush1.msra.mxu0 %v129
    %159 = vmatprep.subr.mxu0 0.0
    %160 = vmatpush1.msra.mxu0 %v130
    %161 = vmatprep.subr.mxu0 0.0
    %162 = vmatpush1.msra.mxu0 %v131
    %163 = vmatprep.subr.mxu0 0.0
    %164 = vmatpush1.msra.mxu0 %v132
    %165 = vmatprep.subr.mxu0 0.0
    %166 = vmatpush1.msra.mxu0 %v133
    %167 = vmatprep.subr.mxu0 0.0
    %168 = vmatpush1.msra.mxu0 %v134
    %169 = vmatprep.subr.mxu0 0.0
    %170 = vmatpush1.msra.mxu0 %v135
    %171 = vmatprep.subr.mxu0 0.0
    %172 = vmatpush1.msra.mxu0 %v136
    %173 = vmatprep.subr.mxu0 0.0
    %174 = vmatpush1.msra.mxu0 %v137
    %175 = vmatprep.subr.mxu0 0.0
    %176 = vmatpush1.msra.mxu0 %v138
    %177 = vmatprep.subr.mxu0 0.0
    %178 = vmatpush1.msra.mxu0 %v139
    %179 = vmatprep.subr.mxu0 0.0
    %180 = vmatpush1.msra.mxu0 0.0
    %181 = vmatprep.subr.mxu0 0.0
    %182 = vmatpush1.msra.mxu0 0.0
    %183 = vmatprep.subr.mxu0 0.0
    %184 = vmatpush1.msra.mxu0 0.0
    %185 = vmatprep.subr.mxu0 0.0
    %186 = vmatpush1.msra.mxu0 0.0
    %187 = vmatprep.subr.mxu0 0.0
    %188 = vmatpush1.msra.mxu0 0.0
    %189 = vmatprep.subr.mxu0 0.0
    %190 = vmatpush1.msra.mxu0 0.0
    %191 = vmatprep.subr.mxu0 0.0
    %192 = vmatpush1.msra.mxu0 0.0
    %193 = vmatprep.subr.mxu0 0.0
    %194 = vmatpush1.msra.mxu0 0.0
    %195 = vmatprep.subr.mxu0 0.0
    %196 = vmatpush1.msra.mxu0 0.0
    %197 = vmatprep.subr.mxu0 0.0
    %198 = vmatpush1.msra.mxu0 0.0
    %199 = vmatprep.subr.mxu0 0.0
    %200 = vmatpush1.msra.mxu0 0.0
    %201 = vmatprep.subr.mxu0 0.0
    %202 = vmatpush1.msra.mxu0 0.0
    %203 = vmatprep.subr.mxu0 0.0
    %204 = vmatpush1.msra.mxu0 0.0
    %205 = vmatprep.subr.mxu0 0.0
    %206 = vmatpush1.msra.mxu0 0.0
    %207 = vmatprep.subr.mxu0 0.0
    %208 = vmatpush1.msra.mxu0 0.0
    %209 = vmatprep.subr.mxu0 0.0
    %210 = vmatpush1.msra.mxu0 0.0
    %211 = vmatprep.mubr.f32.mxu0 0.0
    %212 = vmatmul.mubr.f32.gmra.mrb[0].mxu0 %v123
    %v213 = vpop.f32.mrb[0].mxu0
    %v214 = vadd.f32 %v145, %v213
    %v215 = vpop.f32.mrb[0].mxu0
    %216 = vdwg.mxu0
    %v217 = vtanh.pop %v214
    %v218 = vld [vmem:[%s5] sm:$0xff]
    %v219 = vld [vmem:[%s5 + $0x8] sm:$0xff]
    %v220 = vld [vmem:[%s5 + $0x10] sm:$0xff]
    %v221 = vld [vmem:[%s5 + $0x18] sm:$0xff]
    %v222 = vld [vmem:[%s5 + $0x20] sm:$0xff]
    %v223 = vld [vmem:[%s5 + $0x28] sm:$0xff]
    %v224 = vld [vmem:[%s5 + $0x30] sm:$0xff]
    %v225 = vld [vmem:[%s5 + $0x38] sm:$0xff]
    %v226 = vld [vmem:[%s5 + $0x40] sm:$0xff]
    %v227 = vld [vmem:[%s5 + $0x48] sm:$0xff]
    %v228 = vld [vmem:[%s5 + $0x50] sm:$0xff]
    %v229 = vld [vmem:[%s5 + $0x58] sm:$0xff]
    %v230 = vld [vmem:[%s5 + $0x60] sm:$0xff]
    %v231 = vld [vmem:[%s5 + $0x68] sm:$0xff]
    %v232 = vld [vmem:[%s5 + $0x70] sm:$0xff]
    %v233 = vld [vmem:[%s5 + $0x78] sm:$0xff]
    %v234 = vld [vmem:[%s6] sm:$0x1]
    %v236 = vlaneseq
    %v237 = vshrl.u32 %v236, 7
    %v238 = vsub.s32 0, %v237
    %v239 = vrot.slane %v234, %v238
    %241 = vmatprep.subr.mxu0 0.0
    %242 = vmatpush1.msra.mxu0 %v218
    %243 = vmatprep.subr.mxu0 0.0
    %244 = vmatpush1.msra.mxu0 %v219
    %245 = vmatprep.subr.mxu0 0.0
    %246 = vmatpush1.msra.mxu0 %v220
    %247 = vmatprep.subr.mxu0 0.0
    %248 = vmatpush1.msra.mxu0 %v221
    %249 = vmatprep.subr.mxu0 0.0
    %250 = vmatpush1.msra.mxu0 %v222
    %251 = vmatprep.subr.mxu0 0.0
    %252 = vmatpush1.msra.mxu0 %v223
    %253 = vmatprep.subr.mxu0 0.0
    %254 = vmatpush1.msra.mxu0 %v224
    %255 = vmatprep.subr.mxu0 0.0
    %256 = vmatpush1.msra.mxu0 %v225
    %257 = vmatprep.subr.mxu0 0.0
    %258 = vmatpush1.msra.mxu0 %v226
    %259 = vmatprep.subr.mxu0 0.0
    %260 = vmatpush1.msra.mxu0 %v227
    %261 = vmatprep.subr.mxu0 0.0
    %262 = vmatpush1.msra.mxu0 %v228
    %263 = vmatprep.subr.mxu0 0.0
    %264 = vmatpush1.msra.mxu0 %v229
    %265 = vmatprep.subr.mxu0 0.0
    %266 = vmatpush1.msra.mxu0 %v230
    %267 = vmatprep.subr.mxu0 0.0
    %268 = vmatpush1.msra.mxu0 %v231
    %269 = vmatprep.subr.mxu0 0.0
    %270 = vmatpush1.msra.mxu0 %v232
    %271 = vmatprep.subr.mxu0 0.0
    %272 = vmatpush1.msra.mxu0 %v233
    %273 = vmatprep.subr.mxu0 0.0
    %274 = vmatpush1.msra.mxu0 0.0
    %275 = vmatprep.subr.mxu0 0.0
    %276 = vmatpush1.msra.mxu0 0.0
    %277 = vmatprep.subr.mxu0 0.0
    %278 = vmatpush1.msra.mxu0 0.0
    %279 = vmatprep.subr.mxu0 0.0
    %280 = vmatpush1.msra.mxu0 0.0
    %281 = vmatprep.subr.mxu0 0.0
    %282 = vmatpush1.msra.mxu0 0.0
    %283 = vmatprep.subr.mxu0 0.0
    %284 = vmatpush1.msra.mxu0 0.0
    %285 = vmatprep.subr.mxu0 0.0
    %286 = vmatpush1.msra.mxu0 0.0
    %287 = vmatprep.subr.mxu0 0.0
    %288 = vmatpush1.msra.mxu0 0.0
    %289 = vmatprep.subr.mxu0 0.0
    %290 = vmatpush1.msra.mxu0 0.0
    %291 = vmatprep.subr.mxu0 0.0
    %292 = vmatpush1.msra.mxu0 0.0
    %293 = vmatprep.subr.mxu0 0.0
    %294 = vmatpush1.msra.mxu0 0.0
    %295 = vmatprep.subr.mxu0 0.0
    %296 = vmatpush1.msra.mxu0 0.0
    %297 = vmatprep.subr.mxu0 0.0
    %298 = vmatpush1.msra.mxu0 0.0
    %299 = vmatprep.subr.mxu0 0.0
    %300 = vmatpush1.msra.mxu0 0.0
    %301 = vmatprep.subr.mxu0 0.0
    %302 = vmatpush1.msra.mxu0 0.0
    %303 = vmatprep.subr.mxu0 0.0
    %304 = vmatpush1.msra.mxu0 0.0
    %305 = vmatprep.mubr.f32.mxu0 0.0
    %306 = vmatmul.mubr.f32.gmra.mrb[0].mxu0 %v217
    %v307 = vpop.f32.mrb[0].mxu0
    %v308 = vadd.f32 %v239, %v307
    %v309 = vpop.f32.mrb[0].mxu0
    %310 = vdwg.mxu0
    %vm311 = vcmask 48128
    %v312 = vsel %vm311, %v308, -inf
    %313 = vmax.xlane.f32.xlu0 %v312
    %v314 = vpop.xlane.xlu0 %313
    %v315 = vsub.f32 %v308, %v314
    %v316 = vmul.f32 %v315, 1.442695
    %v317 = vpow.pop %v316
    %v318 = vsel %vm311, %v317, 0.0
    %319 = vadd.xlane.f32.xlu0 %v318
    %v320 = vpop.xlane.xlu0 %319
    %v321 = vrcp.pop %v320
    %v322 = vmul.f32 %v320, %v321
    %v323 = vsub.f32 2.0, %v322
    %v324 = vmul.f32 %v321, %v323
    %v325 = vmul.f32 %v317, %v324
    %326 = vst.msk [vmem:[#allocation5] sm:$0xff] %vm311, %v325
    %vm327 = vcmask 56368
    %328 = vst.msk [vmem:[#allocation5] sm:$0xff] %vm327, %v308
    // Predicated region
    $region34: #{tpu_custom_call.1} parent=1 // pred_check
      _
    $region35: #{tpu_custom_call.1} parent=1 // pred_check_branch
      %330 = sbr.rel (0) target = $region37
    $region36: #{tpu_custom_call.1} parent=1 // pred_region
      %s332 = ssub.s32 128, 128
      %333 = vsyncadd [#allocation4], %s332
      %s335 = sshll.u32 [#allocation5], 4
      %s336 = int_to_ptr.vmem [resolvable:$true] %s335
      %338 = dma.vmem_to_hbm [thread:$0]  %s336, 128, %s7, [#allocation4]
    $region37: #{tpu_custom_call.1} parent=1 // pred_fallthru
      _
    // Predicated region
    $region38: #{tpu_custom_call.1} parent=1 // pred_check
      _
    $region39: #{tpu_custom_call.1} parent=1 // pred_check_branch
      %340 = sbr.rel (0) target = $region41
    $region40: #{tpu_custom_call.1} parent=1 // pred_region
      %341 = dma.done [#allocation4], 128
    $region41: #{tpu_custom_call.1} parent=1 // pred_fallthru
      _
    %342 = vsyncpa [#allocation3], 1
    %343 = vsyncpa [#allocation4], 1

</llo_original>
